<compile_context>
chip_gen: v6e
topology: v6e:2x2x1
jax: 0.10.0
libtpu: 0.0.40
codegen_flags: <defaults>
</compile_context>

<pallas_src>
import functools

import jax
import jax.numpy as jnp
from jax.experimental import pallas as pl
from jax.experimental.pallas import tpu as pltpu

_LANES = 128  # vreg lane width (last dim of every block)


# ----------------------------------------------------------------------------
# Kernel
# ----------------------------------------------------------------------------
def _leaky_relu_kernel(x_ref, o_ref, *, negative_slope):
    x = x_ref[...]
    slope = jnp.asarray(negative_slope, dtype=x.dtype)  # avoid dtype promotion
    o_ref[...] = jnp.where(x >= 0, x, x * slope)


# ----------------------------------------------------------------------------
# Generation-aware sizing helpers (evaluated once at trace time)
# ----------------------------------------------------------------------------
@functools.lru_cache(maxsize=None)
def _chip_generation():
    try:
        kind = jax.devices()[0].device_kind.lower()
    except Exception:  # pragma: no cover - CPU/interpret fallback
        return "other"
    if "v7" in kind or "7x" in kind:
        return "v7"
    if "v6" in kind:
        return "v6"
    return "other"  # v5e / v5p / v4 / unknown -> conservative sizing


def _target_block_bytes(gen):
    if gen == "v7":
        return 8 << 20   # ~3.2 TB/s HBM: amortize the ~0.35us/step overhead
    if gen == "v6":
        return 4 << 20   # ~1.4 TB/s
    return 2 << 20       # v5e: 16 MiB scoped-VMEM default, ~0.8 TB/s


def _pallas_min_bytes(gen):
    # Below this, plain fused XLA elementwise beats kernel-launch overhead.
    return (4 << 20) if gen == "v7" else (1 << 20)


def _round_up(a, b):
    return (a + b - 1) // b * b


# ----------------------------------------------------------------------------
# pallas_call wrapper
# ----------------------------------------------------------------------------
def _leaky_relu_2d(x2d, negative_slope, row_tile, vmem_limit_bytes):
    rows = x2d.shape[0]
    kernel = functools.partial(_leaky_relu_kernel, negative_slope=negative_slope)
    return pl.pallas_call(
        kernel,
        out_shape=jax.ShapeDtypeStruct(x2d.shape, x2d.dtype),
        grid_spec=pltpu.PrefetchScalarGridSpec(
            num_scalar_prefetch=0,
            grid=(pl.cdiv(rows, row_tile),),
            in_specs=[pl.BlockSpec((row_tile, _LANES), lambda i: (i, 0))],
            out_specs=pl.BlockSpec((row_tile, _LANES), lambda i: (i, 0)),
        ),
        compiler_params=pltpu.CompilerParams(
            dimension_semantics=("parallel",),
            vmem_limit_bytes=vmem_limit_bytes,
        ),
    )(x2d)


def _xla_leaky_relu(x, negative_slope):
    # Single fused elementwise pass: 1 read + 1 write of the tensor.
    return jnp.where(x >= 0, x, x * jnp.asarray(negative_slope, x.dtype))


def _leaky_relu_array(x, negative_slope, *, force_pallas=False):
    """Apply leaky relu elementwise to an arbitrarily shaped array."""
    n = x.size
    itemsize = x.dtype.itemsize
    gen = _chip_generation()

    # Fallback cases (all still exactly correct, just not worth / not able to
    # go through the kernel without extra full-tensor copies):
    #   - tiny inputs (launch + pipeline warmup dominates)
    #   - totals not a multiple of 128 lanes (pad+slice would 3x HBM traffic)
    #   - exotic itemsizes
    use_fallback = (
        n == 0
        or itemsize not in (1, 2, 4)
        or n % _LANES != 0
        or (not force_pallas and n * itemsize < _pallas_min_bytes(gen))
    )
    if use_fallback:
        return _xla_leaky_relu(x, negative_slope)

    x2d = x.reshape(-1, _LANES)  # free: row-major reshape of a contiguous array
    rows = x2d.shape[0]

    # Dtype-aware sublane alignment: (8,128) f32, (16,128) bf16, (32,128) int8.
    sub = 8 * (4 // itemsize)
    max_rows = max(sub, _target_block_bytes(gen) // (_LANES * itemsize) // sub * sub)

    if gen == "v7":
        # 2 TensorCores: aim for >= 2 grid blocks so both cores get work.
        half_rows = _round_up(max((rows + 1) // 2, 1), sub)
        row_tile = max(sub, min(max_rows, half_rows))
    else:
        # Single TensorCore: biggest legal block that fits the target size.
        row_tile = max(sub, min(max_rows, _round_up(rows, sub)))

    # 1 input + 1 output, each double-buffered -> 4 live blocks.  Only raise the
    # scoped-VMEM limit when that approaches the smallest default (16 MiB); the
    # v7x 8 MiB blocks land at 32 MiB used -> ask for 40 MiB (< 64 MiB physical).
    needed = 4 * row_tile * _LANES * itemsize
    vmem_limit = needed + (8 << 20) if needed > (24 << 20) else None

    y2d = _leaky_relu_2d(x2d, negative_slope, row_tile, vmem_limit)
    return y2d.reshape(x.shape)


def leaky_relu_forward(x, negative_slope=0.01):
    """Mirrors LeakyReLU.forward.  Torch concatenates tuple/list inputs along
    dim 0, activates, and splits back; for an elementwise op this is identical
    to activating each tensor independently (and avoids two full HBM copies)."""
    if isinstance(x, (tuple, list)):
        return tuple(_leaky_relu_array(k, negative_slope) for k in x)
    return _leaky_relu_array(x, negative_slope)


# ----------------------------------------------------------------------------
# Self-test
# ----------------------------------------------------------------------------
def _ref(v, slope=0.01):
    return jnp.where(v >= 0, v, jnp.asarray(slope, v.dtype) * v)


if __name__ == "__main__":
    key = jax.random.PRNGKey(0)
    k1, k2, k3, k4, k5 = jax.random.split(key, 5)

    # 1) Small NCHW input from the module spec (dispatches to the XLA fallback).
    x_small = jax.random.normal(k1, (2, 4, 16, 16), dtype=jnp.float32)
    y_small = jax.block_until_ready(leaky_relu_forward(x_small, 0.01))
    assert y_small.shape == x_small.shape
    assert jnp.allclose(y_small, _ref(x_small), atol=1e-6), "small tensor mismatch"

    # 2) Same small input forced through the Pallas kernel (f32 and bf16 tiling).
    y_forced = jax.block_until_ready(
        _leaky_relu_array(x_small, 0.01, force_pallas=True))
    assert jnp.allclose(y_forced, _ref(x_small), atol=1e-6), "forced pallas mismatch"
    x_bf16 = x_small.astype(jnp.bfloat16)
    y_bf16 = jax.block_until_ready(
        _leaky_relu_array(x_bf16, 0.01, force_pallas=True))
    assert jnp.allclose(y_bf16.astype(jnp.float32),
                        _ref(x_bf16).astype(jnp.float32)), "bf16 pallas mismatch"

    # 3) Tuple input path (per-tensor activation, shapes preserved).
    xa = jax.random.normal(k2, (2, 4, 16, 16), dtype=jnp.float32)
    xb = jax.random.normal(k3, (3, 4, 16, 16), dtype=jnp.float32)
    ya, yb = leaky_relu_forward((xa, xb), 0.01)
    ya = jax.block_until_ready(ya)
    yb = jax.block_until_ready(yb)
    assert ya.shape == xa.shape and yb.shape == xb.shape
    assert jnp.allclose(ya, _ref(xa), atol=1e-6)
    assert jnp.allclose(yb, _ref(xb), atol=1e-6)

    # 4) Larger aligned feature map (4 MiB) — Pallas streaming path on all gens,
    #    no pad and no slice (total is a multiple of 128).
    x_big = jax.random.normal(k4, (8, 32, 64, 64), dtype=jnp.float32)
    y_big = jax.block_until_ready(leaky_relu_forward(x_big, 0.01))
    assert y_big.shape == x_big.shape
    assert jnp.allclose(y_big, _ref(x_big), atol=1e-6), "big tensor mismatch"

    # 5) Awkward total (not a multiple of 128 lanes) — handled by one fused XLA
    #    elementwise pass (1R+1W) instead of pad + kernel + slice (~3x traffic).
    x_odd = jax.random.normal(k5, (7, 13, 101, 101), dtype=jnp.float32)
    y_odd = jax.block_until_ready(leaky_relu_forward(x_odd, 0.01))
    assert y_odd.shape == x_odd.shape
    assert jnp.allclose(y_odd, _ref(x_odd), atol=1e-6), "odd tensor mismatch"

    print("KERNEL_OK")
</pallas_src>

<mosaic_0001>
module attributes {stable_mosaic.version = 11 : i64} {
  func.func @_leaky_relu_kernel(%arg0: i32, %arg1: memref<16x128xf32, #tpu.memory_space<vmem>>, %arg2: memref<16x128xf32, #tpu.memory_space<vmem>>) attributes {dimension_semantics = [#tpu.dimension_semantics<parallel>], iteration_bounds = array<i64: 1>, scalar_prefetch = 0 : i64, scratch_operands = 0 : i64, tpu.core_type = #tpu.core_type<tc>, window_params = [{transform_indices = @transform_0, window_bounds = array<i64: 16, 128>}, {transform_indices = @transform_1, window_bounds = array<i64: 16, 128>}]} {
    %c0 = arith.constant 0 : index
    %c0_0 = arith.constant 0 : index
    %0 = vector.load %arg1[%c0, %c0_0] : memref<16x128xf32, #tpu.memory_space<vmem>>, vector<16x128xf32>
    %cst = arith.constant 0.000000e+00 : f32
    %1 = vector.broadcast %cst : f32 to vector<16x128xf32>
    %2 = arith.cmpf oge, %0, %1 : vector<16x128xf32>
    %cst_1 = arith.constant 0.00999999977 : f32
    %3 = vector.broadcast %cst_1 : f32 to vector<16x128xf32>
    %4 = arith.mulf %0, %3 : vector<16x128xf32>
    %5 = arith.select %2, %0, %4 : vector<16x128xi1>, vector<16x128xf32>
    %c0_2 = arith.constant 0 : index
    %c0_3 = arith.constant 0 : index
    %6 = vector.load %arg2[%c0_2, %c0_3] : memref<16x128xf32, #tpu.memory_space<vmem>>, vector<16x128xf32>
    tpu.vector_store %arg2[%c0_2, %c0_3], %5 {strides = array<i32>} : memref<16x128xf32, #tpu.memory_space<vmem>>, vector<16x128xf32>,
    return
  }
  func.func @transform_0(%arg0: i32) -> (i32, i32) {
    %c0_i32 = arith.constant 0 : i32
    %c0_i32_0 = arith.constant 0 : i32
    return %arg0, %c0_i32 : i32, i32
  }
  func.func @transform_1(%arg0: i32) -> (i32, i32) {
    %c0_i32 = arith.constant 0 : i32
    %c0_i32_0 = arith.constant 0 : i32
    return %arg0, %c0_i32 : i32, i32
  }
}

</mosaic_0001>

<llo_original>
// kernel: tpu_custom_call.1
$region0: #{tpu_custom_call.1}
  #allocation0 [shape = 'u32[]', space=smem, size = 0x4, offset = 0x4, fixed_abs, tag = 'smem constant byte address 0x4 - core index']
  #allocation1 [shape = 'u32[144,128]{1,0:T(1,128)}', space=vmem, size = 0x12000, scoped, tag = 'internal scratch']
  %s0 = inlined_call_operand.hbm [shape: f32[16,128], index: 0, kind: input, shape index: {}]
  %s1 = inlined_call_operand.hbm [shape: f32[16,128], index: 1, kind: output, shape index: {}]
  %s2 = sld [smem:[#allocation0]]
  $region18: #{tpu_custom_call.1} parent=0
    _
  %s4 = ssub.s32 1, %s2
  %s5 = scalar_select 0, %s4, %s2
  $region1: #{tpu_custom_call.1} parent=0
    #allocation2 [shape = 'u8[8192]{0}', space=vmem, size = 0x2000, scoped, tag = 'input window, operand 0, single buffered']
    #allocation3 [shape = 's32[1]{0}', space=sflag, size = 0x4, scoped, tag = 'scoped memory for tpu_custom_call.1']
    #allocation4 [shape = 's32[1]{0}', space=sflag, size = 0x4, scoped, tag = 'scoped memory for tpu_custom_call.1']
    #allocation5 [shape = 'u8[8192]{0}', space=vmem, size = 0x2000, scoped, tag = 'output window, operand 0, single buffered']
    %6 = vsyncpa [#allocation3], 0
    %7 = vsyncpa [#allocation4], 0
    // Predicated region
    $region2: #{tpu_custom_call.1} parent=1 // pred_check
      _
    $region3: #{tpu_custom_call.1} parent=1 // pred_check_branch
      %9 = sbr.rel (0) target = $region5
    $region4: #{tpu_custom_call.1} parent=1 // pred_region
      %s11 = ssub.s32 256, 256
      %12 = vsyncadd [#allocation3], %s11
      %s13 = sshll.u32 [#allocation2], 4
      %s14 = int_to_ptr.vmem [resolvable:$true] %s13
      %19 = dma.hbm_to_vmem [thread:$0]  %s0, 256, %s14, [#allocation3], 128, 128, 8
    $region5: #{tpu_custom_call.1} parent=1 // pred_fallthru
      _
    // Predicated region
    $region6: #{tpu_custom_call.1} parent=1 // pred_check
      _
    $region7: #{tpu_custom_call.1} parent=1 // pred_check_branch
      %21 = sbr.rel (0) target = $region9
    $region8: #{tpu_custom_call.1} parent=1 // pred_region
      %22 = dma.done [#allocation3], 256
    $region9: #{tpu_custom_call.1} parent=1 // pred_fallthru
      _
    %v23 = vld [vmem:[#allocation2] sm:$0xff]
    %v24 = vld [vmem:[#allocation2 + $0x8] sm:$0xff]
    %vm25 = vcmp.ge.f32.partialorder %v23, 0.0
    %vm26 = vcmp.ge.f32.partialorder %v24, 0.0
    %v27 = vmul.f32 %v23, 0.01
    %v28 = vmul.f32 %v24, 0.01
    %v29 = vsel %vm25, %v23, %v27
    %v30 = vsel %vm26, %v24, %v28
    %31 = vst [vmem:[#allocation5] sm:$0xff] %v29
    %32 = vst [vmem:[#allocation5 + $0x8] sm:$0xff] %v30
    // Predicated region
    $region10: #{tpu_custom_call.1} parent=1 // pred_check
      _
    $region11: #{tpu_custom_call.1} parent=1 // pred_check_branch
      %34 = sbr.rel (0) target = $region13
    $region12: #{tpu_custom_call.1} parent=1 // pred_region
      %s36 = ssub.s32 256, 256
      %37 = vsyncadd [#allocation4], %s36
      %s38 = sshll.u32 [#allocation5], 4
      %s39 = int_to_ptr.vmem [resolvable:$true] %s38
      %44 = dma.vmem_to_hbm [thread:$0]  %s39, 256, %s1, [#allocation4], 128, 128, 8
    $region13: #{tpu_custom_call.1} parent=1 // pred_fallthru
      _
    // Predicated region
    $region14: #{tpu_custom_call.1} parent=1 // pred_check
      _
    $region15: #{tpu_custom_call.1} parent=1 // pred_check_branch
      %46 = sbr.rel (0) target = $region17
    $region16: #{tpu_custom_call.1} parent=1 // pred_region
      %47 = dma.done [#allocation4], 256
    $region17: #{tpu_custom_call.1} parent=1 // pred_fallthru
      _
    %48 = vsyncpa [#allocation3], 1
    %49 = vsyncpa [#allocation4], 1

</llo_original>
